<compile_context>
chip_gen: v7x
topology: tpu7x:2x2x1
jax: 0.10.0
libtpu: 0.0.40
codegen_flags: <defaults>
</compile_context>

<pallas_src>
import jax
import jax.numpy as jnp
from jax.experimental import pallas as pl
from jax.experimental.pallas import tpu as pltpu

LAMBDA_U = 0.01
VISI_LOSS = 0.01

_SUBLANE = 8
_LANE = 128


def _round_up(x, m):
    return ((x + m - 1) // m) * m


def _cdiv(a, b):
    return -(-a // b)


def _vmem_input_budget():
    """Generation-aware double-buffered *input* byte budget per grid step."""
    try:
        cap = int(pltpu.get_tpu_info().vmem_capacity_bytes)
    except Exception:
        cap = 64 * 1024 * 1024  # conservative (v7x per-TC VMEM)
    # ~1/3 of physical VMEM, capped: ~21 MiB on v7x (64 MiB/TC), 24 MiB on
    # v5e/v6e (128 MiB).  The explicit vmem_limit_bytes below covers the case
    # where this exceeds a generation's default scoped-VMEM limit (v5e).
    return max(8 * 1024 * 1024, min(cap // 3, 24 * 1024 * 1024))


def _plan_tiles(rows_list, itemsize_pairs, budget):
    """Pick a common grid size and per-pair row tiles under the VMEM budget."""
    rows_max = max(rows_list)
    cap_tiles = max(1, _cdiv(rows_max, _SUBLANE))
    # Keep >= 4 grid steps when the data allows, so dimension_semantics
    # ("parallel",) can still split the grid across both v7x TensorCores.
    n_tiles = min(4, cap_tiles)

    def step_bytes(nt):
        tot = 0
        for rows, (ia, ib) in zip(rows_list, itemsize_pairs):
            t = _round_up(_cdiv(rows, nt), _SUBLANE)
            tot += 2 * t * _LANE * (ia + ib)  # double-buffered a & b slabs
        return tot

    while step_bytes(n_tiles) > budget and n_tiles < cap_tiles:
        n_tiles = min(cap_tiles, max(n_tiles + 1, (n_tiles * 3) // 2))

    tiles = [_round_up(_cdiv(rows, n_tiles), _SUBLANE) for rows in rows_list]
    return n_tiles, tiles, step_bytes(n_tiles)


def _make_kernel(pair_meta, n_tiles):
    """pair_meta: list of (rows, tile, n_tiles_p) per pair."""
    n_pairs = len(pair_meta)

    def kernel(*refs):
        in_refs = refs[: 2 * n_pairs]
        out_refs = refs[2 * n_pairs:]
        pid = pl.program_id(0)

        for p, (rows, tile, n_tiles_p) in enumerate(pair_meta):
            a = in_refs[2 * p][...].astype(jnp.float32)
            b = in_refs[2 * p + 1][...].astype(jnp.float32)
            d = a - b
            sq = d * d

            def vreg_partial(x, _tile=tile):
                # (tile,128) -> (tile/8, 8, 128) -> sum over vreg groups:
                # pure VPU elementwise adds (the reshape stays on (8,128)
                # tile boundaries), no XLU reduce, no broadcast.
                return jnp.sum(
                    x.reshape(_tile // _SUBLANE, _SUBLANE, _LANE), axis=0)[None]

            covers_grid = (n_tiles_p == n_tiles)
            exact = (tile * n_tiles_p == rows)

            if covers_grid and exact:
                out_refs[p][...] = vreg_partial(sq)
            elif covers_grid:
                # Only the final grid step has a ragged row tail: write the
                # unmasked partial, then overwrite it on the last step with
                # the masked one (stale rows of the clipped DMA block never
                # reach the final output).
                out_refs[p][...] = vreg_partial(sq)

                @pl.when(pid == n_tiles - 1)
                def _(sq=sq, p=p, rows=rows, tile=tile, vp=vreg_partial):
                    row = jax.lax.broadcasted_iota(jnp.int32, (tile, 1), 0)
                    valid = (row + pid * tile) < rows
                    out_refs[p][...] = vp(
                        jnp.where(valid, sq, jnp.float32(0.0)))
            else:
                # Pair with fewer tiles than the grid: its index_map clamps to
                # its last block for steps past n_tiles_p; the row mask zeroes
                # those steps (and any ragged tail), so every element is
                # counted exactly once.
                row = jax.lax.broadcasted_iota(jnp.int32, (tile, 1), 0)
                valid = (row + pid * tile) < rows
                out_refs[p][...] = vreg_partial(
                    jnp.where(valid, sq, jnp.float32(0.0)))

    return kernel


def _pairwise_sse_sums(pairs):
    """For same-size lane-dense (a, b) slab pairs, return f32[n_pairs] of
    sum((a - b)^2), computed in a single pallas_call."""
    n_pairs = len(pairs)
    arrays, rows_list, isz_list = [], [], []
    for a, b in pairs:
        assert a.ndim == 2 and a.shape[1] == _LANE and a.shape == b.shape
        arrays += [a, b]
        rows_list.append(a.shape[0])
        isz_list.append((a.dtype.itemsize, b.dtype.itemsize))

    budget = _vmem_input_budget()
    n_tiles, tiles, step_bytes = _plan_tiles(rows_list, isz_list, budget)

    in_specs, pair_meta = [], []
    for rows, tile in zip(rows_list, tiles):
        n_tiles_p = _cdiv(rows, tile)
        if n_tiles_p == n_tiles:
            idx = lambda i: (i, 0)
        else:
            # Clamp to the pair's last block; the block stays resident (no
            # re-DMA) once the index stops changing.
            idx = (lambda i, _last=n_tiles_p - 1: (jnp.minimum(i, _last), 0))
        spec = pl.BlockSpec((tile, _LANE), idx)
        in_specs += [spec, spec]
        pair_meta.append((rows, tile, n_tiles_p))

    out_spec = pl.BlockSpec((1, _SUBLANE, _LANE), lambda i: (i, 0, 0))
    out_shape = tuple(
        jax.ShapeDtypeStruct((n_tiles, _SUBLANE, _LANE), jnp.float32)
        for _ in range(n_pairs))

    vmem_limit = int(max(16 * 1024 * 1024, step_bytes + 4 * 1024 * 1024))

    partials = pl.pallas_call(
        _make_kernel(pair_meta, n_tiles),
        out_shape=out_shape,
        grid_spec=pltpu.PrefetchScalarGridSpec(
            num_scalar_prefetch=0,
            grid=(n_tiles,),
            in_specs=in_specs,
            out_specs=tuple(out_spec for _ in range(n_pairs)),
        ),
        compiler_params=pltpu.CompilerParams(
            dimension_semantics=("parallel",),
            vmem_limit_bytes=vmem_limit),
    )(*arrays)

    return jnp.stack([p.sum() for p in partials])


def _lane_densify(x):
    """Flatten to a lane-dense (rows, 128) slab.

    Copies (zero-pads) only when the flat length is not already a multiple of
    128 or the slab would be smaller than one (8,128) tile; large aligned
    tensors are a free reshape.  Both members of a pair get identical padding,
    so the padded region contributes 0 to the SSE.
    """
    flat = x.reshape(-1)
    n = flat.shape[0]
    if n % _LANE != 0 or n < _SUBLANE * _LANE:
        padded = _round_up(max(n, 1), _SUBLANE * _LANE)
        flat = jnp.pad(flat, (0, padded - n))
    return flat.reshape(-1, _LANE)


def block_nerf_loss(inputs, targets, *, lam_u=LAMBDA_U, visi_loss=VISI_LOSS):
    tgt_rgb = targets[..., :3]
    rgb_c = inputs['rgb_coarse']
    rgb_f = inputs['rgb_fine']

    # torch .detach() -> stop_gradient (forward values unchanged).
    # TODO(synk): if a backward pass is added later, re-implement the detach
    # semantics in the custom VJP as well.
    tc_real = jax.lax.stop_gradient(inputs['transmittance_coarse_real'])
    tf_real = jax.lax.stop_gradient(inputs['transmittance_fine_real'])
    tc_vis = inputs['transmittance_coarse_vis']
    tf_vis = inputs['transmittance_fine_vis']
    # torch .squeeze() drops the trailing singleton of the vis tensors; the
    # elementwise difference then matches element-for-element, so flattening
    # both sides directly preserves the SSE.  Just check the sizes.
    assert tc_real.size == tc_vis.size and tf_real.size == tf_vis.size

    pairs = [
        (_lane_densify(rgb_c), _lane_densify(tgt_rgb)),
        (_lane_densify(rgb_f), _lane_densify(tgt_rgb)),
        (_lane_densify(tc_real), _lane_densify(tc_vis)),
        (_lane_densify(tf_real), _lane_densify(tf_vis)),
    ]
    sse = _pairwise_sse_sums(pairs)   # single fused kernel launch

    return {
        'rgb_coarse': lam_u * sse[0] / jnp.float32(rgb_c.size),
        'rgb_fine': sse[1] / jnp.float32(rgb_f.size),
        'transmittance_coarse':
            lam_u * visi_loss * sse[2] / jnp.float32(tc_real.size),
        'transmittance_fine':
            visi_loss * sse[3] / jnp.float32(tf_real.size),
    }


def _reference_loss(inputs, targets, lam_u=LAMBDA_U, visi_loss=VISI_LOSS):
    tgt = targets[..., :3]
    return {
        'rgb_coarse': lam_u * jnp.mean((inputs['rgb_coarse'] - tgt) ** 2),
        'rgb_fine': jnp.mean((inputs['rgb_fine'] - tgt) ** 2),
        'transmittance_coarse': lam_u * visi_loss * jnp.mean(
            (inputs['transmittance_coarse_real']
             - jnp.squeeze(inputs['transmittance_coarse_vis'], axis=-1)) ** 2),
        'transmittance_fine': visi_loss * jnp.mean(
            (inputs['transmittance_fine_real']
             - jnp.squeeze(inputs['transmittance_fine_vis'], axis=-1)) ** 2),
    }


if __name__ == "__main__":
    def make_case(key, n_rays, ns_coarse, ns_fine):
        ks = jax.random.split(key, 7)
        inputs = {
            'rgb_coarse': jax.random.uniform(ks[0], (n_rays, 3), jnp.float32),
            'rgb_fine': jax.random.uniform(ks[1], (n_rays, 3), jnp.float32),
            'transmittance_coarse_real':
                jax.random.uniform(ks[2], (n_rays, ns_coarse), jnp.float32),
            'transmittance_coarse_vis':
                jax.random.uniform(ks[3], (n_rays, ns_coarse, 1), jnp.float32),
            'transmittance_fine_real':
                jax.random.uniform(ks[4], (n_rays, ns_fine), jnp.float32),
            'transmittance_fine_vis':
                jax.random.uniform(ks[5], (n_rays, ns_fine, 1), jnp.float32),
        }
        targets = jax.random.uniform(ks[6], (n_rays, 4), jnp.float32)
        return inputs, targets

    key = jax.random.PRNGKey(0)
    k1, k2 = jax.random.split(key)
    cases = (
        # Case 1: mismatched coarse/fine sample counts (per-pair tiles in one
        #         launch), row-aligned transmittance slabs.
        (k1, 64, 64, 192),
        # Case 2: ragged row tail in the lane-dense transmittance slabs
        #         (exercises the pl.when last-tile mask path).
        (k2, 100, 64, 64),
    )
    for case_key, n_rays, nsc, nsf in cases:
        inputs, targets = make_case(case_key, n_rays, nsc, nsf)
        losses = jax.jit(block_nerf_loss)(inputs, targets)
        losses = jax.tree_util.tree_map(jax.block_until_ready, losses)
        ref = _reference_loss(inputs, targets)
        for name in ('rgb_coarse', 'rgb_fine',
                     'transmittance_coarse', 'transmittance_fine'):
            assert jnp.allclose(losses[name], ref[name],
                                rtol=1e-5, atol=1e-6), (
                n_rays, name, float(losses[name]), float(ref[name]))

    print("KERNEL_OK")
</pallas_src>

<mosaic_0001>
module attributes {stable_mosaic.version = 11 : i64} {
  func.func @kernel(%arg0: i32, %arg1: memref<8x128xf32, #tpu.memory_space<vmem>>, %arg2: memref<8x128xf32, #tpu.memory_space<vmem>>, %arg3: memref<8x128xf32, #tpu.memory_space<vmem>>, %arg4: memref<8x128xf32, #tpu.memory_space<vmem>>, %arg5: memref<8x128xf32, #tpu.memory_space<vmem>>, %arg6: memref<8x128xf32, #tpu.memory_space<vmem>>, %arg7: memref<24x128xf32, #tpu.memory_space<vmem>>, %arg8: memref<24x128xf32, #tpu.memory_space<vmem>>, %arg9: memref<1x8x128xf32, #tpu.memory_space<vmem>>, %arg10: memref<1x8x128xf32, #tpu.memory_space<vmem>>, %arg11: memref<1x8x128xf32, #tpu.memory_space<vmem>>, %arg12: memref<1x8x128xf32, #tpu.memory_space<vmem>>) attributes {dimension_semantics = [#tpu.dimension_semantics<parallel>], iteration_bounds = array<i64: 4>, scalar_prefetch = 0 : i64, scratch_operands = 0 : i64, tpu.core_type = #tpu.core_type<tc>, window_params = [{transform_indices = @transform_0, window_bounds = array<i64: 8, 128>}, {transform_indices = @transform_1, window_bounds = array<i64: 8, 128>}, {transform_indices = @transform_2, window_bounds = array<i64: 8, 128>}, {transform_indices = @transform_3, window_bounds = array<i64: 8, 128>}, {transform_indices = @transform_4, window_bounds = array<i64: 8, 128>}, {transform_indices = @transform_5, window_bounds = array<i64: 8, 128>}, {transform_indices = @transform_6, window_bounds = array<i64: 24, 128>}, {transform_indices = @transform_7, window_bounds = array<i64: 24, 128>}, {transform_indices = @transform_8, window_bounds = array<i64: 1, 8, 128>}, {transform_indices = @transform_9, window_bounds = array<i64: 1, 8, 128>}, {transform_indices = @transform_10, window_bounds = array<i64: 1, 8, 128>}, {transform_indices = @transform_11, window_bounds = array<i64: 1, 8, 128>}]} {
    %c0 = arith.constant 0 : index
    %c0_0 = arith.constant 0 : index
    %0 = vector.load %arg1[%c0, %c0_0] : memref<8x128xf32, #tpu.memory_space<vmem>>, vector<8x128xf32>
    %c0_1 = arith.constant 0 : index
    %c0_2 = arith.constant 0 : index
    %1 = vector.load %arg2[%c0_1, %c0_2] : memref<8x128xf32, #tpu.memory_space<vmem>>, vector<8x128xf32>
    %2 = arith.subf %0, %1 : vector<8x128xf32>
    %3 = arith.mulf %2, %2 : vector<8x128xf32>
    %4 = tpu.iota {dimensions = array<i32: 0>} : vector<8x1xi32>
    %c8_i32 = arith.constant 8 : i32
    %5 = arith.muli %arg0, %c8_i32 : i32
    %6 = vector.broadcast %5 : i32 to vector<8x1xi32>
    %7 = arith.addi %4, %6 : vector<8x1xi32>
    %c8_i32_3 = arith.constant 8 : i32
    %8 = vector.broadcast %c8_i32_3 : i32 to vector<8x1xi32>
    %9 = arith.cmpi slt, %7, %8 : vector<8x1xi32>
    %cst = arith.constant 0.000000e+00 : f32
    %10 = vector.shape_cast %9 : vector<8x1xi1> to vector<8x1xi1>
    %11 = vector.broadcast %10 : vector<8x1xi1> to vector<8x128xi1>
    %12 = vector.broadcast %cst : f32 to vector<8x128xf32>
    %13 = arith.select %11, %3, %12 : vector<8x128xi1>, vector<8x128xf32>
    %14 = vector.shape_cast %13 : vector<8x128xf32> to vector<1x8x128xf32>
    %cst_4 = arith.constant dense<0.000000e+00> : vector<8x128xf32>
    %15 = vector.multi_reduction <add>, %14, %cst_4 [0] : vector<1x8x128xf32> to vector<8x128xf32>
    %16 = vector.shape_cast %15 : vector<8x128xf32> to vector<1x8x128xf32>
    %c0_5 = arith.constant 0 : index
    %c0_6 = arith.constant 0 : index
    %c0_7 = arith.constant 0 : index
    %17 = vector.load %arg9[%c0_5, %c0_6, %c0_7] : memref<1x8x128xf32, #tpu.memory_space<vmem>>, vector<1x8x128xf32>
    tpu.vector_store %arg9[%c0_5, %c0_6, %c0_7], %16 {strides = array<i32>} : memref<1x8x128xf32, #tpu.memory_space<vmem>>, vector<1x8x128xf32>,
    %c0_8 = arith.constant 0 : index
    %c0_9 = arith.constant 0 : index
    %18 = vector.load %arg3[%c0_8, %c0_9] : memref<8x128xf32, #tpu.memory_space<vmem>>, vector<8x128xf32>
    %c0_10 = arith.constant 0 : index
    %c0_11 = arith.constant 0 : index
    %19 = vector.load %arg4[%c0_10, %c0_11] : memref<8x128xf32, #tpu.memory_space<vmem>>, vector<8x128xf32>
    %20 = arith.subf %18, %19 : vector<8x128xf32>
    %21 = arith.mulf %20, %20 : vector<8x128xf32>
    %22 = tpu.iota {dimensions = array<i32: 0>} : vector<8x1xi32>
    %c8_i32_12 = arith.constant 8 : i32
    %23 = arith.muli %arg0, %c8_i32_12 : i32
    %24 = vector.broadcast %23 : i32 to vector<8x1xi32>
    %25 = arith.addi %22, %24 : vector<8x1xi32>
    %c8_i32_13 = arith.constant 8 : i32
    %26 = vector.broadcast %c8_i32_13 : i32 to vector<8x1xi32>
    %27 = arith.cmpi slt, %25, %26 : vector<8x1xi32>
    %cst_14 = arith.constant 0.000000e+00 : f32
    %28 = vector.shape_cast %27 : vector<8x1xi1> to vector<8x1xi1>
    %29 = vector.broadcast %28 : vector<8x1xi1> to vector<8x128xi1>
    %30 = vector.broadcast %cst_14 : f32 to vector<8x128xf32>
    %31 = arith.select %29, %21, %30 : vector<8x128xi1>, vector<8x128xf32>
    %32 = vector.shape_cast %31 : vector<8x128xf32> to vector<1x8x128xf32>
    %cst_15 = arith.constant dense<0.000000e+00> : vector<8x128xf32>
    %33 = vector.multi_reduction <add>, %32, %cst_15 [0] : vector<1x8x128xf32> to vector<8x128xf32>
    %34 = vector.shape_cast %33 : vector<8x128xf32> to vector<1x8x128xf32>
    %c0_16 = arith.constant 0 : index
    %c0_17 = arith.constant 0 : index
    %c0_18 = arith.constant 0 : index
    %35 = vector.load %arg10[%c0_16, %c0_17, %c0_18] : memref<1x8x128xf32, #tpu.memory_space<vmem>>, vector<1x8x128xf32>
    tpu.vector_store %arg10[%c0_16, %c0_17, %c0_18], %34 {strides = array<i32>} : memref<1x8x128xf32, #tpu.memory_space<vmem>>, vector<1x8x128xf32>,
    %c0_19 = arith.constant 0 : index
    %c0_20 = arith.constant 0 : index
    %36 = vector.load %arg5[%c0_19, %c0_20] : memref<8x128xf32, #tpu.memory_space<vmem>>, vector<8x128xf32>
    %c0_21 = arith.constant 0 : index
    %c0_22 = arith.constant 0 : index
    %37 = vector.load %arg6[%c0_21, %c0_22] : memref<8x128xf32, #tpu.memory_space<vmem>>, vector<8x128xf32>
    %38 = arith.subf %36, %37 : vector<8x128xf32>
    %39 = arith.mulf %38, %38 : vector<8x128xf32>
    %40 = vector.shape_cast %39 : vector<8x128xf32> to vector<1x8x128xf32>
    %cst_23 = arith.constant dense<0.000000e+00> : vector<8x128xf32>
    %41 = vector.multi_reduction <add>, %40, %cst_23 [0] : vector<1x8x128xf32> to vector<8x128xf32>
    %42 = vector.shape_cast %41 : vector<8x128xf32> to vector<1x8x128xf32>
    %c0_24 = arith.constant 0 : index
    %c0_25 = arith.constant 0 : index
    %c0_26 = arith.constant 0 : index
    %43 = vector.load %arg11[%c0_24, %c0_25, %c0_26] : memref<1x8x128xf32, #tpu.memory_space<vmem>>, vector<1x8x128xf32>
    tpu.vector_store %arg11[%c0_24, %c0_25, %c0_26], %42 {strides = array<i32>} : memref<1x8x128xf32, #tpu.memory_space<vmem>>, vector<1x8x128xf32>,
    %c0_27 = arith.constant 0 : index
    %c0_28 = arith.constant 0 : index
    %44 = vector.load %arg7[%c0_27, %c0_28] : memref<24x128xf32, #tpu.memory_space<vmem>>, vector<24x128xf32>
    %c0_29 = arith.constant 0 : index
    %c0_30 = arith.constant 0 : index
    %45 = vector.load %arg8[%c0_29, %c0_30] : memref<24x128xf32, #tpu.memory_space<vmem>>, vector<24x128xf32>
    %46 = arith.subf %44, %45 : vector<24x128xf32>
    %47 = arith.mulf %46, %46 : vector<24x128xf32>
    %48 = vector.shape_cast %47 : vector<24x128xf32> to vector<3x8x128xf32>
    %cst_31 = arith.constant dense<0.000000e+00> : vector<8x128xf32>
    %49 = vector.multi_reduction <add>, %48, %cst_31 [0] : vector<3x8x128xf32> to vector<8x128xf32>
    %50 = vector.shape_cast %49 : vector<8x128xf32> to vector<1x8x128xf32>
    %c0_32 = arith.constant 0 : index
    %c0_33 = arith.constant 0 : index
    %c0_34 = arith.constant 0 : index
    %51 = vector.load %arg12[%c0_32, %c0_33, %c0_34] : memref<1x8x128xf32, #tpu.memory_space<vmem>>, vector<1x8x128xf32>
    tpu.vector_store %arg12[%c0_32, %c0_33, %c0_34], %50 {strides = array<i32>} : memref<1x8x128xf32, #tpu.memory_space<vmem>>, vector<1x8x128xf32>,
    return
  }
  func.func @transform_0(%arg0: i32) -> (i32, i32) {
    %c0_i32 = arith.constant 0 : i32
    %0 = arith.minsi %arg0, %c0_i32 : i32
    %c0_i32_0 = arith.constant 0 : i32
    %c0_i32_1 = arith.constant 0 : i32
    return %0, %c0_i32_0 : i32, i32
  }
  func.func @transform_1(%arg0: i32) -> (i32, i32) {
    %c0_i32 = arith.constant 0 : i32
    %0 = arith.minsi %arg0, %c0_i32 : i32
    %c0_i32_0 = arith.constant 0 : i32
    %c0_i32_1 = arith.constant 0 : i32
    return %0, %c0_i32_0 : i32, i32
  }
  func.func @transform_2(%arg0: i32) -> (i32, i32) {
    %c0_i32 = arith.constant 0 : i32
    %0 = arith.minsi %arg0, %c0_i32 : i32
    %c0_i32_0 = arith.constant 0 : i32
    %c0_i32_1 = arith.constant 0 : i32
    return %0, %c0_i32_0 : i32, i32
  }
  func.func @transform_3(%arg0: i32) -> (i32, i32) {
    %c0_i32 = arith.constant 0 : i32
    %0 = arith.minsi %arg0, %c0_i32 : i32
    %c0_i32_0 = arith.constant 0 : i32
    %c0_i32_1 = arith.constant 0 : i32
    return %0, %c0_i32_0 : i32, i32
  }
  func.func @transform_4(%arg0: i32) -> (i32, i32) {
    %c0_i32 = arith.constant 0 : i32
    %c0_i32_0 = arith.constant 0 : i32
    return %arg0, %c0_i32 : i32, i32
  }
  func.func @transform_5(%arg0: i32) -> (i32, i32) {
    %c0_i32 = arith.constant 0 : i32
    %c0_i32_0 = arith.constant 0 : i32
    return %arg0, %c0_i32 : i32, i32
  }
  func.func @transform_6(%arg0: i32) -> (i32, i32) {
    %c0_i32 = arith.constant 0 : i32
    %c0_i32_0 = arith.constant 0 : i32
    return %arg0, %c0_i32 : i32, i32
  }
  func.func @transform_7(%arg0: i32) -> (i32, i32) {
    %c0_i32 = arith.constant 0 : i32
    %c0_i32_0 = arith.constant 0 : i32
    return %arg0, %c0_i32 : i32, i32
  }
  func.func @transform_8(%arg0: i32) -> (i32, i32, i32) {
    %c0_i32 = arith.constant 0 : i32
    %c0_i32_0 = arith.constant 0 : i32
    %c0_i32_1 = arith.constant 0 : i32
    return %arg0, %c0_i32, %c0_i32_0 : i32, i32, i32
  }
  func.func @transform_9(%arg0: i32) -> (i32, i32, i32) {
    %c0_i32 = arith.constant 0 : i32
    %c0_i32_0 = arith.constant 0 : i32
    %c0_i32_1 = arith.constant 0 : i32
    return %arg0, %c0_i32, %c0_i32_0 : i32, i32, i32
  }
  func.func @transform_10(%arg0: i32) -> (i32, i32, i32) {
    %c0_i32 = arith.constant 0 : i32
    %c0_i32_0 = arith.constant 0 : i32
    %c0_i32_1 = arith.constant 0 : i32
    return %arg0, %c0_i32, %c0_i32_0 : i32, i32, i32
  }
  func.func @transform_11(%arg0: i32) -> (i32, i32, i32) {
    %c0_i32 = arith.constant 0 : i32
    %c0_i32_0 = arith.constant 0 : i32
    %c0_i32_1 = arith.constant 0 : i32
    return %arg0, %c0_i32, %c0_i32_0 : i32, i32, i32
  }
}

</mosaic_0001>

<llo_original>
// kernel: block_nerf_loss.1
$region0: #{block_nerf_loss.1}
  #allocation0 [shape = 'u32[]', space=smem, size = 0x4, offset = 0x4, fixed_abs, tag = 'smem constant byte address 0x4 - core index']
  #allocation1 [shape = 'u32[144,128]{1,0:T(1,128)}', space=vmem, size = 0x12000, scoped, tag = 'internal scratch']
  %s0 = inlined_call_operand.vmem [shape: f32[8,128], index: 0, kind: input, shape index: {}]
  %s1 = inlined_call_operand.vmem [shape: f32[8,128], index: 1, kind: input, shape index: {}, may-alias: {1,3}]
  %s2 = inlined_call_operand.vmem [shape: f32[8,128], index: 2, kind: input, shape index: {}]
  %s3 = inlined_call_operand.vmem [shape: f32[8,128], index: 3, kind: input, shape index: {}, may-alias: {1,3}]
  %s4 = inlined_call_operand.vmem [shape: f32[32,128], index: 4, kind: input, shape index: {}]
  %s5 = inlined_call_operand.vmem [shape: f32[32,128], index: 5, kind: input, shape index: {}]
  %s6 = inlined_call_operand.vmem [shape: f32[96,128], index: 6, kind: input, shape index: {}]
  %s7 = inlined_call_operand.vmem [shape: f32[96,128], index: 7, kind: input, shape index: {}]
  %s8 = inlined_call_operand.vmem [shape: f32[4,8,128], index: 8, kind: output, shape index: {0}]
  %s9 = inlined_call_operand.vmem [shape: f32[4,8,128], index: 9, kind: output, shape index: {1}]
  %s10 = inlined_call_operand.vmem [shape: f32[4,8,128], index: 10, kind: output, shape index: {2}]
  %s11 = inlined_call_operand.vmem [shape: f32[4,8,128], index: 11, kind: output, shape index: {3}]
  %12 = xla_tuple %s8, %s9, %s10, %s11
  %s13 = sld [smem:[#allocation0]]
  $region89: #{block_nerf_loss.1} parent=0
    _
  %s15 = ssub.s32 1, %s13
  %s16 = scalar_select 0, %s15, %s13
  loop: start=0, step=1, limit=6
  $region2: #{block_nerf_loss.1} parent=0 // loop_pre_header
    _
  $region3: #{block_nerf_loss.1} parent=0 // loop_header
    %s18 = sphi 0, %s22
    %p19 = scmp.ge.s32.totalorder %s18, 6
    %s32 = sphi 0, %s34
    %s35 = sphi 0, %s32
    %s36 = sphi 0, %s35
    %s52 = sphi 0, %s36
    %s62 = sphi 0, %s64
    %s65 = sphi 0, %s62
    %s66 = sphi 0, %s65
    %s82 = sphi 0, %s66
    %s92 = sphi 0, %s94
    %s95 = sphi 0, %s92
    %s96 = sphi 0, %s95
    %s112 = sphi 0, %s96
    %s122 = sphi 0, %s124
    %s125 = sphi 0, %s122
    %s126 = sphi 0, %s125
    %s142 = sphi 0, %s126
    %s148 = sphi 0, %s150
    %s151 = sphi 0, %s148
    %s152 = sphi 0, %s151
    %s168 = sphi 0, %s152
    %s174 = sphi 0, %s176
    %s177 = sphi 0, %s174
    %s178 = sphi 0, %s177
    %s194 = sphi 0, %s178
    %s200 = sphi 0, %s202
    %s203 = sphi 0, %s200
    %s204 = sphi 0, %s203
    %s220 = sphi 0, %s204
    %s226 = sphi 0, %s228
    %s229 = sphi 0, %s226
    %s230 = sphi 0, %s229
    %s246 = sphi 0, %s230
    %s252 = sphi 0, %s254
    %s255 = sphi 0, %s252
    %s256 = sphi 0, %s255
    %s272 = sphi 0, %s256
    %s278 = sphi 0, %s280
    %s281 = sphi 0, %s278
    %s282 = sphi 0, %s281
    %s298 = sphi 0, %s282
    %s304 = sphi 0, %s306
    %s307 = sphi 0, %s304
    %s308 = sphi 0, %s307
    %s324 = sphi 0, %s308
    %s330 = sphi 0, %s332
    %s333 = sphi 0, %s330
    %s334 = sphi 0, %s333
    %s350 = sphi 0, %s334
  $region4: #{block_nerf_loss.1} parent=0 // loop_header_branch
    %21 = sbr.rel (%p19) target = $region8
  $region5: #{block_nerf_loss.1} parent=0 // loop_body
    %s23 = ssub.s32 %s18, 1
    %s24 = ssub.s32 %s18, 2
    %s25 = sadd.s32 %s18, 1
    %p26 = scmp.lt.s32.totalorder %s18, 0
    %s27 = scalar_select %p26, %s18, 0
    %p28 = scmp.lt.s32.totalorder %s25, 0
    %s29 = scalar_select %p28, %s25, 0
    %s30 = ssub.s32 %s27, %s29
    %p31 = scmp.eq.s32.totalorder %s30, 0
    %s33 = sadd.s32 %s32, 1
    %s34 = scalar_select %p31, %s32, %s33
    %p37 = pneg %p31
    %p38 = scmp.eq.s32.totalorder %s18, 3
    %p39 = por %p37, %p38
    %p40 = scmp.ne.s32.totalorder %s32, %s35
    %p41 = scmp.eq.s32.totalorder %s18, 0
    %p42 = por %p40, %p41
    %p43 = scmp.ne.s32.totalorder %s32, %s35
    %p44 = scmp.eq.s32.totalorder %s23, 3
    %p45 = por %p43, %p44
    %p46 = scmp.ne.s32.totalorder %s35, %s36
    %p47 = scmp.eq.s32.totalorder %s23, 0
    %p48 = por %p46, %p47
    %p49 = scmp.ne.s32.totalorder %s35, %s36
    %p50 = scmp.eq.s32.totalorder %s24, 3
    %p51 = por %p49, %p50
    %p53 = scmp.ne.s32.totalorder %s36, %s52
    %p54 = scmp.eq.s32.totalorder %s24, 0
    %p55 = por %p53, %p54
    %p56 = scmp.lt.s32.totalorder %s18, 0
    %s57 = scalar_select %p56, %s18, 0
    %p58 = scmp.lt.s32.totalorder %s25, 0
    %s59 = scalar_select %p58, %s25, 0
    %s60 = ssub.s32 %s57, %s59
    %p61 = scmp.eq.s32.totalorder %s60, 0
    %s63 = sadd.s32 %s62, 1
    %s64 = scalar_select %p61, %s62, %s63
    %p67 = pneg %p61
    %p68 = scmp.eq.s32.totalorder %s18, 3
    %p69 = por %p67, %p68
    %p70 = scmp.ne.s32.totalorder %s62, %s65
    %p71 = scmp.eq.s32.totalorder %s18, 0
    %p72 = por %p70, %p71
    %p73 = scmp.ne.s32.totalorder %s62, %s65
    %p74 = scmp.eq.s32.totalorder %s23, 3
    %p75 = por %p73, %p74
    %p76 = scmp.ne.s32.totalorder %s65, %s66
    %p77 = scmp.eq.s32.totalorder %s23, 0
    %p78 = por %p76, %p77
    %p79 = scmp.ne.s32.totalorder %s65, %s66
    %p80 = scmp.eq.s32.totalorder %s24, 3
    %p81 = por %p79, %p80
    %p83 = scmp.ne.s32.totalorder %s66, %s82
    %p84 = scmp.eq.s32.totalorder %s24, 0
    %p85 = por %p83, %p84
    %p86 = scmp.lt.s32.totalorder %s18, 0
    %s87 = scalar_select %p86, %s18, 0
    %p88 = scmp.lt.s32.totalorder %s25, 0
    %s89 = scalar_select %p88, %s25, 0
    %s90 = ssub.s32 %s87, %s89
    %p91 = scmp.eq.s32.totalorder %s90, 0
    %s93 = sadd.s32 %s92, 1
    %s94 = scalar_select %p91, %s92, %s93
    %p97 = pneg %p91
    %p98 = scmp.eq.s32.totalorder %s18, 3
    %p99 = por %p97, %p98
    %p100 = scmp.ne.s32.totalorder %s92, %s95
    %p101 = scmp.eq.s32.totalorder %s18, 0
    %p102 = por %p100, %p101
    %p103 = scmp.ne.s32.totalorder %s92, %s95
    %p104 = scmp.eq.s32.totalorder %s23, 3
    %p105 = por %p103, %p104
    %p106 = scmp.ne.s32.totalorder %s95, %s96
    %p107 = scmp.eq.s32.totalorder %s23, 0
    %p108 = por %p106, %p107
    %p109 = scmp.ne.s32.totalorder %s95, %s96
    %p110 = scmp.eq.s32.totalorder %s24, 3
    %p111 = por %p109, %p110
    %p113 = scmp.ne.s32.totalorder %s96, %s112
    %p114 = scmp.eq.s32.totalorder %s24, 0
    %p115 = por %p113, %p114
    %p116 = scmp.lt.s32.totalorder %s18, 0
    %s117 = scalar_select %p116, %s18, 0
    %p118 = scmp.lt.s32.totalorder %s25, 0
    %s119 = scalar_select %p118, %s25, 0
    %s120 = ssub.s32 %s117, %s119
    %p121 = scmp.eq.s32.totalorder %s120, 0
    %s123 = sadd.s32 %s122, 1
    %s124 = scalar_select %p121, %s122, %s123
    %p127 = pneg %p121
    %p128 = scmp.eq.s32.totalorder %s18, 3
    %p129 = por %p127, %p128
    %p130 = scmp.ne.s32.totalorder %s122, %s125
    %p131 = scmp.eq.s32.totalorder %s18, 0
    %p132 = por %p130, %p131
    %p133 = scmp.ne.s32.totalorder %s122, %s125
    %p134 = scmp.eq.s32.totalorder %s23, 3
    %p135 = por %p133, %p134
    %p136 = scmp.ne.s32.totalorder %s125, %s126
    %p137 = scmp.eq.s32.totalorder %s23, 0
    %p138 = por %p136, %p137
    %p139 = scmp.ne.s32.totalorder %s125, %s126
    %p140 = scmp.eq.s32.totalorder %s24, 3
    %p141 = por %p139, %p140
    %p143 = scmp.ne.s32.totalorder %s126, %s142
    %p144 = scmp.eq.s32.totalorder %s24, 0
    %p145 = por %p143, %p144
    %s146 = ssub.s32 %s18, %s25
    %p147 = scmp.eq.s32.totalorder %s146, 0
    %s149 = sadd.s32 %s148, 1
    %s150 = scalar_select %p147, %s148, %s149
    %p153 = pneg %p147
    %p154 = scmp.eq.s32.totalorder %s18, 3
    %p155 = por %p153, %p154
    %p156 = scmp.ne.s32.totalorder %s148, %s151
    %p157 = scmp.eq.s32.totalorder %s18, 0
    %p158 = por %p156, %p157
    %p159 = scmp.ne.s32.totalorder %s148, %s151
    %p160 = scmp.eq.s32.totalorder %s23, 3
    %p161 = por %p159, %p160
    %p162 = scmp.ne.s32.totalorder %s151, %s152
    %p163 = scmp.eq.s32.totalorder %s23, 0
    %p164 = por %p162, %p163
    %p165 = scmp.ne.s32.totalorder %s151, %s152
    %p166 = scmp.eq.s32.totalorder %s24, 3
    %p167 = por %p165, %p166
    %p169 = scmp.ne.s32.totalorder %s152, %s168
    %p170 = scmp.eq.s32.totalorder %s24, 0
    %p171 = por %p169, %p170
    %s172 = ssub.s32 %s18, %s25
    %p173 = scmp.eq.s32.totalorder %s172, 0
    %s175 = sadd.s32 %s174, 1
    %s176 = scalar_select %p173, %s174, %s175
    %p179 = pneg %p173
    %p180 = scmp.eq.s32.totalorder %s18, 3
    %p181 = por %p179, %p180
    %p182 = scmp.ne.s32.totalorder %s174, %s177
    %p183 = scmp.eq.s32.totalorder %s18, 0
    %p184 = por %p182, %p183
    %p185 = scmp.ne.s32.totalorder %s174, %s177
    %p186 = scmp.eq.s32.totalorder %s23, 3
    %p187 = por %p185, %p186
    %p188 = scmp.ne.s32.totalorder %s177, %s178
    %p189 = scmp.eq.s32.totalorder %s23, 0
    %p190 = por %p188, %p189
    %p191 = scmp.ne.s32.totalorder %s177, %s178
    %p192 = scmp.eq.s32.totalorder %s24, 3
    %p193 = por %p191, %p192
    %p195 = scmp.ne.s32.totalorder %s178, %s194
    %p196 = scmp.eq.s32.totalorder %s24, 0
    %p197 = por %p195, %p196
    %s198 = ssub.s32 %s18, %s25
    %p199 = scmp.eq.s32.totalorder %s198, 0
    %s201 = sadd.s32 %s200, 1
    %s202 = scalar_select %p199, %s200, %s201
    %p205 = pneg %p199
    %p206 = scmp.eq.s32.totalorder %s18, 3
    %p207 = por %p205, %p206
    %p208 = scmp.ne.s32.totalorder %s200, %s203
    %p209 = scmp.eq.s32.totalorder %s18, 0
    %p210 = por %p208, %p209
    %p211 = scmp.ne.s32.totalorder %s200, %s203
    %p212 = scmp.eq.s32.totalorder %s23, 3
    %p213 = por %p211, %p212
    %p214 = scmp.ne.s32.totalorder %s203, %s204
    %p215 = scmp.eq.s32.totalorder %s23, 0
    %p216 = por %p214, %p215
    %p217 = scmp.ne.s32.totalorder %s203, %s204
    %p218 = scmp.eq.s32.totalorder %s24, 3
    %p219 = por %p217, %p218
    %p221 = scmp.ne.s32.totalorder %s204, %s220
    %p222 = scmp.eq.s32.totalorder %s24, 0
    %p223 = por %p221, %p222
    %s224 = ssub.s32 %s18, %s25
    %p225 = scmp.eq.s32.totalorder %s224, 0
    %s227 = sadd.s32 %s226, 1
    %s228 = scalar_select %p225, %s226, %s227
    %p231 = pneg %p225
    %p232 = scmp.eq.s32.totalorder %s18, 3
    %p233 = por %p231, %p232
    %p234 = scmp.ne.s32.totalorder %s226, %s229
    %p235 = scmp.eq.s32.totalorder %s18, 0
    %p236 = por %p234, %p235
    %p237 = scmp.ne.s32.totalorder %s226, %s229
    %p238 = scmp.eq.s32.totalorder %s23, 3
    %p239 = por %p237, %p238
    %p240 = scmp.ne.s32.totalorder %s229, %s230
    %p241 = scmp.eq.s32.totalorder %s23, 0
    %p242 = por %p240, %p241
    %p243 = scmp.ne.s32.totalorder %s229, %s230
    %p244 = scmp.eq.s32.totalorder %s24, 3
    %p245 = por %p243, %p244
    %p247 = scmp.ne.s32.totalorder %s230, %s246
    %p248 = scmp.eq.s32.totalorder %s24, 0
    %p249 = por %p247, %p248
    %s250 = ssub.s32 %s18, %s25
    %p251 = scmp.eq.s32.totalorder %s250, 0
    %s253 = sadd.s32 %s252, 1
    %s254 = scalar_select %p251, %s252, %s253
    %p257 = pneg %p251
    %p258 = scmp.eq.s32.totalorder %s18, 3
    %p259 = por %p257, %p258
    %p260 = scmp.ne.s32.totalorder %s252, %s255
    %p261 = scmp.eq.s32.totalorder %s18, 0
    %p262 = por %p260, %p261
    %p263 = scmp.ne.s32.totalorder %s252, %s255
    %p264 = scmp.eq.s32.totalorder %s23, 3
    %p265 = por %p263, %p264
    %p266 = scmp.ne.s32.totalorder %s255, %s256
    %p267 = scmp.eq.s32.totalorder %s23, 0
    %p268 = por %p266, %p267
    %p269 = scmp.ne.s32.totalorder %s255, %s256
    %p270 = scmp.eq.s32.totalorder %s24, 3
    %p271 = por %p269, %p270
    %p273 = scmp.ne.s32.totalorder %s256, %s272
    %p274 = scmp.eq.s32.totalorder %s24, 0
    %p275 = por %p273, %p274
    %s276 = ssub.s32 %s18, %s25
    %p277 = scmp.eq.s32.totalorder %s276, 0
    %s279 = sadd.s32 %s278, 1
    %s280 = scalar_select %p277, %s278, %s279
    %p283 = pneg %p277
    %p284 = scmp.eq.s32.totalorder %s18, 3
    %p285 = por %p283, %p284
    %p286 = scmp.ne.s32.totalorder %s278, %s281
    %p287 = scmp.eq.s32.totalorder %s18, 0
    %p288 = por %p286, %p287
    %p289 = scmp.ne.s32.totalorder %s278, %s281
    %p290 = scmp.eq.s32.totalorder %s23, 3
    %p291 = por %p289, %p290
    %p292 = scmp.ne.s32.totalorder %s281, %s282
    %p293 = scmp.eq.s32.totalorder %s23, 0
    %p294 = por %p292, %p293
    %p295 = scmp.ne.s32.totalorder %s281, %s282
    %p296 = scmp.eq.s32.totalorder %s24, 3
    %p297 = por %p295, %p296
    %p299 = scmp.ne.s32.totalorder %s282, %s298
    %p300 = scmp.eq.s32.totalorder %s24, 0
    %p301 = por %p299, %p300
    %s302 = ssub.s32 %s18, %s25
    %p303 = scmp.eq.s32.totalorder %s302, 0
    %s305 = sadd.s32 %s304, 1
    %s306 = scalar_select %p303, %s304, %s305
    %p309 = pneg %p303
    %p310 = scmp.eq.s32.totalorder %s18, 3
    %p311 = por %p309, %p310
    %p312 = scmp.ne.s32.totalorder %s304, %s307
    %p313 = scmp.eq.s32.totalorder %s18, 0
    %p314 = por %p312, %p313
    %p315 = scmp.ne.s32.totalorder %s304, %s307
    %p316 = scmp.eq.s32.totalorder %s23, 3
    %p317 = por %p315, %p316
    %p318 = scmp.ne.s32.totalorder %s307, %s308
    %p319 = scmp.eq.s32.totalorder %s23, 0
    %p320 = por %p318, %p319
    %p321 = scmp.ne.s32.totalorder %s307, %s308
    %p322 = scmp.eq.s32.totalorder %s24, 3
    %p323 = por %p321, %p322
    %p325 = scmp.ne.s32.totalorder %s308, %s324
    %p326 = scmp.eq.s32.totalorder %s24, 0
    %p327 = por %p325, %p326
    %s328 = ssub.s32 %s18, %s25
    %p329 = scmp.eq.s32.totalorder %s328, 0
    %s331 = sadd.s32 %s330, 1
    %s332 = scalar_select %p329, %s330, %s331
    %p335 = pneg %p329
    %p336 = scmp.eq.s32.totalorder %s18, 3
    %p337 = por %p335, %p336
    %p338 = scmp.ne.s32.totalorder %s330, %s333
    %p339 = scmp.eq.s32.totalorder %s18, 0
    %p340 = por %p338, %p339
    %p341 = scmp.ne.s32.totalorder %s330, %s333
    %p342 = scmp.eq.s32.totalorder %s23, 3
    %p343 = por %p341, %p342
    %p344 = scmp.ne.s32.totalorder %s333, %s334
    %p345 = scmp.eq.s32.totalorder %s23, 0
    %p346 = por %p344, %p345
    %p347 = scmp.ne.s32.totalorder %s333, %s334
    %p348 = scmp.eq.s32.totalorder %s24, 3
    %p349 = por %p347, %p348
    %p351 = scmp.ne.s32.totalorder %s334, %s350
    %p352 = scmp.eq.s32.totalorder %s24, 0
    %p353 = por %p351, %p352
    %p354 = scmp.le.s32.totalorder 1, %s18
    %p355 = scmp.lt.s32.totalorder %s18, 5
    %p356 = pnand %p354, %p355
    %p357 = pneg %p356
    // Predicated region
    $region9: #{block_nerf_loss.1} parent=5 // pred_check
      _
    $region10: #{block_nerf_loss.1} parent=5 // pred_check_branch
      %359 = sbr.rel (%p356) target = $region12
    $region11: #{block_nerf_loss.1} parent=5 // pred_region
      %s360 = ssub.s32 %s18, 1
    $region12: #{block_nerf_loss.1} parent=5 // pred_fallthru
      _
    %p361 = scmp.lt.s32.totalorder %s18, 4
    // Predicated region
    $region13: #{block_nerf_loss.1} parent=5 // pred_check
      %p362 = pneg %p361
    $region14: #{block_nerf_loss.1} parent=5 // pred_check_branch
      %364 = sbr.rel (%p362) target = $region16
    $region15: #{block_nerf_loss.1} parent=5 // pred_region
      // Predicated region
      $region17: #{block_nerf_loss.1} parent=15 // pred_check
        %p365 = pneg %p42
      $region18: #{block_nerf_loss.1} parent=15 // pred_check_branch
        %367 = sbr.rel (%p365) target = $region20
      $region19: #{block_nerf_loss.1} parent=15 // pred_region
        %p368 = scmp.lt.s32.totalorder %s18, 0
        %s369 = scalar_select %p368, %s18, 0
        %p370 = scmp.lt.s32.totalorder %s369, 0
        %s371 = scalar_select %p370, %s369, 0
        %s372 = smul.addr %s371, 8
        %s373 = scalar_lea.vmem %s0, %s372
        %p374 = scmp.lt.s32.totalorder %s18, 0
        %s375 = scalar_select %p374, %s18, 0
      $region20: #{block_nerf_loss.1} parent=15 // pred_fallthru
        _
      // Predicated region
      $region21: #{block_nerf_loss.1} parent=15 // pred_check
        %p376 = pneg %p72
      $region22: #{block_nerf_loss.1} parent=15 // pred_check_branch
        %378 = sbr.rel (%p376) target = $region24
      $region23: #{block_nerf_loss.1} parent=15 // pred_region
        %p379 = scmp.lt.s32.totalorder %s18, 0
        %s380 = scalar_select %p379, %s18, 0
        %p381 = scmp.lt.s32.totalorder %s380, 0
        %s382 = scalar_select %p381, %s380, 0
        %s383 = smul.addr %s382, 8
        %s384 = scalar_lea.vmem %s1, %s383
        %p385 = scmp.lt.s32.totalorder %s18, 0
        %s386 = scalar_select %p385, %s18, 0
      $region24: #{block_nerf_loss.1} parent=15 // pred_fallthru
        _
      // Predicated region
      $region25: #{block_nerf_loss.1} parent=15 // pred_check
        %p387 = pneg %p102
      $region26: #{block_nerf_loss.1} parent=15 // pred_check_branch
        %389 = sbr.rel (%p387) target = $region28
      $region27: #{block_nerf_loss.1} parent=15 // pred_region
        %p390 = scmp.lt.s32.totalorder %s18, 0
        %s391 = scalar_select %p390, %s18, 0
        %p392 = scmp.lt.s32.totalorder %s391, 0
        %s393 = scalar_select %p392, %s391, 0
        %s394 = smul.addr %s393, 8
        %s395 = scalar_lea.vmem %s2, %s394
        %p396 = scmp.lt.s32.totalorder %s18, 0
        %s397 = scalar_select %p396, %s18, 0
      $region28: #{block_nerf_loss.1} parent=15 // pred_fallthru
        _
      // Predicated region
      $region29: #{block_nerf_loss.1} parent=15 // pred_check
        %p398 = pneg %p132
      $region30: #{block_nerf_loss.1} parent=15 // pred_check_branch
        %400 = sbr.rel (%p398) target = $region32
      $region31: #{block_nerf_loss.1} parent=15 // pred_region
        %p401 = scmp.lt.s32.totalorder %s18, 0
        %s402 = scalar_select %p401, %s18, 0
        %p403 = scmp.lt.s32.totalorder %s402, 0
        %s404 = scalar_select %p403, %s402, 0
        %s405 = smul.addr %s404, 8
        %s406 = scalar_lea.vmem %s3, %s405
        %p407 = scmp.lt.s32.totalorder %s18, 0
        %s408 = scalar_select %p407, %s18, 0
      $region32: #{block_nerf_loss.1} parent=15 // pred_fallthru
        _
      // Predicated region
      $region33: #{block_nerf_loss.1} parent=15 // pred_check
        %p409 = pneg %p158
      $region34: #{block_nerf_loss.1} parent=15 // pred_check_branch
        %411 = sbr.rel (%p409) target = $region36
      $region35: #{block_nerf_loss.1} parent=15 // pred_region
        %p412 = scmp.lt.s32.totalorder %s18, 3
        %s413 = scalar_select %p412, %s18, 3
        %s414 = smul.addr %s413, 8
        %s415 = scalar_lea.vmem %s4, %s414
      $region36: #{block_nerf_loss.1} parent=15 // pred_fallthru
        _
      // Predicated region
      $region37: #{block_nerf_loss.1} parent=15 // pred_check
        %p416 = pneg %p184
      $region38: #{block_nerf_loss.1} parent=15 // pred_check_branch
        %418 = sbr.rel (%p416) target = $region40
      $region39: #{block_nerf_loss.1} parent=15 // pred_region
        %p419 = scmp.lt.s32.totalorder %s18, 3
        %s420 = scalar_select %p419, %s18, 3
        %s421 = smul.addr %s420, 8
        %s422 = scalar_lea.vmem %s5, %s421
      $region40: #{block_nerf_loss.1} parent=15 // pred_fallthru
        _
      // Predicated region
      $region41: #{block_nerf_loss.1} parent=15 // pred_check
        %p423 = pneg %p210
      $region42: #{block_nerf_loss.1} parent=15 // pred_check_branch
        %425 = sbr.rel (%p423) target = $region44
      $region43: #{block_nerf_loss.1} parent=15 // pred_region
        %s426 = smul.u32 3, %s18
        %p427 = scmp.lt.s32.totalorder %s426, 11
        %s428 = scalar_select %p427, %s426, 11
        %s429 = smul.addr %s428, 8
        %s430 = scalar_lea.vmem %s6, %s429
        %s431 = smul.u32 3, %s18
      $region44: #{block_nerf_loss.1} parent=15 // pred_fallthru
        _
      // Predicated region
      $region45: #{block_nerf_loss.1} parent=15 // pred_check
        %p432 = pneg %p236
      $region46: #{block_nerf_loss.1} parent=15 // pred_check_branch
        %434 = sbr.rel (%p432) target = $region48
      $region47: #{block_nerf_loss.1} parent=15 // pred_region
        %s435 = smul.u32 3, %s18
        %p436 = scmp.lt.s32.totalorder %s435, 11
        %s437 = scalar_select %p436, %s435, 11
        %s438 = smul.addr %s437, 8
        %s439 = scalar_lea.vmem %s7, %s438
        %s440 = smul.u32 3, %s18
      $region48: #{block_nerf_loss.1} parent=15 // pred_fallthru
        _
    $region16: #{block_nerf_loss.1} parent=5 // pred_fallthru
      _
    %p441 = scmp.le.s32.totalorder 1, %s18
    %p442 = scmp.lt.s32.totalorder %s18, 5
    %p443 = pnand %p441, %p442
    %p444 = pneg %p443
    // Predicated region
    $region49: #{block_nerf_loss.1} parent=5 // pred_check
      _
    $region50: #{block_nerf_loss.1} parent=5 // pred_check_branch
      %446 = sbr.rel (%p443) target = $region52
    $region51: #{block_nerf_loss.1} parent=5 // pred_region
      %s447 = ssub.s32 %s18, 1
      %p448 = scmp.lt.s32.totalorder %s23, 0
      %s449 = scalar_select %p448, %s23, 0
      %p450 = scmp.lt.s32.totalorder %s449, 0
      %s451 = scalar_select %p450, %s449, 0
      %s452 = smul.addr %s451, 8
      %s453 = scalar_lea.vmem %s0, %s452
      %p454 = pneg %p48
      %p455 = pneg %p45
      %p456 = scmp.lt.s32.totalorder %s23, 0
      %s457 = scalar_select %p456, %s23, 0
      %p458 = scmp.lt.s32.totalorder %s457, 0
      %s459 = scalar_select %p458, %s457, 0
      %s460 = smul.addr %s459, 8
      %s461 = scalar_lea.vmem %s1, %s460
      %p462 = pneg %p78
      %p463 = pneg %p75
      %p464 = scmp.lt.s32.totalorder %s23, 0
      %s465 = scalar_select %p464, %s23, 0
      %p466 = scmp.lt.s32.totalorder %s465, 0
      %s467 = scalar_select %p466, %s465, 0
      %s468 = smul.addr %s467, 8
      %s469 = scalar_lea.vmem %s2, %s468
      %p470 = pneg %p108
      %p471 = pneg %p105
      %p472 = scmp.lt.s32.totalorder %s23, 0
      %s473 = scalar_select %p472, %s23, 0
      %p474 = scmp.lt.s32.totalorder %s473, 0
      %s475 = scalar_select %p474, %s473, 0
      %s476 = smul.addr %s475, 8
      %s477 = scalar_lea.vmem %s3, %s476
      %p478 = pneg %p138
      %p479 = pneg %p135
      %p480 = scmp.lt.s32.totalorder %s23, 3
      %s481 = scalar_select %p480, %s23, 3
      %s482 = smul.addr %s481, 8
      %s483 = scalar_lea.vmem %s4, %s482
      %p484 = pneg %p164
      %p485 = pneg %p161
      %p486 = scmp.lt.s32.totalorder %s23, 3
      %s487 = scalar_select %p486, %s23, 3
      %s488 = smul.addr %s487, 8
      %s489 = scalar_lea.vmem %s5, %s488
      %p490 = pneg %p190
      %p491 = pneg %p187
      %s492 = smul.u32 3, %s23
      %p493 = scmp.lt.s32.totalorder %s492, 11
      %s494 = scalar_select %p493, %s492, 11
      %s495 = smul.addr %s494, 8
      %s496 = scalar_lea.vmem %s6, %s495
      %p497 = pneg %p216
      %p498 = pneg %p213
      %s499 = smul.u32 3, %s23
      %p500 = scmp.lt.s32.totalorder %s499, 11
      %s501 = scalar_select %p500, %s499, 11
      %s502 = smul.addr %s501, 8
      %s503 = scalar_lea.vmem %s7, %s502
      %p504 = pneg %p242
      %p505 = pneg %p239
      %p506 = pneg %p268
      %p507 = pneg %p265
      %p508 = scmp.lt.s32.totalorder %s23, 3
      %s509 = scalar_select %p508, %s23, 3
      %s510 = smul.addr %s509, 8
      %s511 = scalar_lea.vmem %s8, %s510
      %p512 = pneg %p294
      %p513 = pneg %p291
      %p514 = scmp.lt.s32.totalorder %s23, 3
      %s515 = scalar_select %p514, %s23, 3
      %s516 = smul.addr %s515, 8
      %s517 = scalar_lea.vmem %s9, %s516
      %p518 = pneg %p320
      %p519 = pneg %p317
      %p520 = scmp.lt.s32.totalorder %s23, 3
      %s521 = scalar_select %p520, %s23, 3
      %s522 = smul.addr %s521, 8
      %s523 = scalar_lea.vmem %s10, %s522
      %p524 = pneg %p346
      %p525 = pneg %p343
      %p526 = scmp.lt.s32.totalorder %s23, 3
      %s527 = scalar_select %p526, %s23, 3
      %s528 = smul.addr %s527, 8
      %s529 = scalar_lea.vmem %s11, %s528
      %p530 = scmp.lt.s32.totalorder %s23, 0
      %s531 = scalar_select %p530, %s23, 0
      %p532 = scmp.lt.s32.totalorder %s531, 0
      %s533 = scalar_select %p532, %s531, 0
      %s534 = smul.addr %s533, 8
      %s535 = scalar_lea.vmem %s0, %s534
      %p536 = scmp.lt.s32.totalorder %s23, 0
      %s537 = scalar_select %p536, %s23, 0
      %p538 = scmp.lt.s32.totalorder %s23, 0
      %s539 = scalar_select %p538, %s23, 0
      %p540 = scmp.lt.s32.totalorder %s539, 0
      %s541 = scalar_select %p540, %s539, 0
      %s542 = smul.addr %s541, 8
      %s543 = scalar_lea.vmem %s1, %s542
      %p544 = scmp.lt.s32.totalorder %s23, 0
      %s545 = scalar_select %p544, %s23, 0
      %p546 = scmp.lt.s32.totalorder %s23, 0
      %s547 = scalar_select %p546, %s23, 0
      %p548 = scmp.lt.s32.totalorder %s547, 0
      %s549 = scalar_select %p548, %s547, 0
      %s550 = smul.addr %s549, 8
      %s551 = scalar_lea.vmem %s2, %s550
      %p552 = scmp.lt.s32.totalorder %s23, 0
      %s553 = scalar_select %p552, %s23, 0
      %p554 = scmp.lt.s32.totalorder %s23, 0
      %s555 = scalar_select %p554, %s23, 0
      %p556 = scmp.lt.s32.totalorder %s555, 0
      %s557 = scalar_select %p556, %s555, 0
      %s558 = smul.addr %s557, 8
      %s559 = scalar_lea.vmem %s3, %s558
      %p560 = scmp.lt.s32.totalorder %s23, 0
      %s561 = scalar_select %p560, %s23, 0
      %p562 = scmp.lt.s32.totalorder %s23, 3
      %s563 = scalar_select %p562, %s23, 3
      %s564 = smul.addr %s563, 8
      %s565 = scalar_lea.vmem %s4, %s564
      %p566 = scmp.lt.s32.totalorder %s23, 3
      %s567 = scalar_select %p566, %s23, 3
      %s568 = smul.addr %s567, 8
      %s569 = scalar_lea.vmem %s5, %s568
      %s570 = smul.u32 3, %s23
      %p571 = scmp.lt.s32.totalorder %s570, 11
      %s572 = scalar_select %p571, %s570, 11
      %s573 = smul.addr %s572, 8
      %s574 = scalar_lea.vmem %s6, %s573
      %s575 = smul.u32 3, %s23
      %s576 = smul.u32 3, %s23
      %p577 = scmp.lt.s32.totalorder %s576, 11
      %s578 = scalar_select %p577, %s576, 11
      %s579 = smul.addr %s578, 8
      %s580 = scalar_lea.vmem %s7, %s579
      %s581 = smul.u32 3, %s23
      %p582 = scmp.lt.s32.totalorder %s23, 3
      %s583 = scalar_select %p582, %s23, 3
      %s584 = smul.addr %s583, 8
      %s585 = scalar_lea.vmem %s8, %s584
      %p586 = scmp.lt.s32.totalorder %s23, 3
      %s587 = scalar_select %p586, %s23, 3
      %s588 = smul.addr %s587, 8
      %s589 = scalar_lea.vmem %s9, %s588
      %p590 = scmp.lt.s32.totalorder %s23, 3
      %s591 = scalar_select %p590, %s23, 3
      %s592 = smul.addr %s591, 8
      %s593 = scalar_lea.vmem %s10, %s592
      %p594 = scmp.lt.s32.totalorder %s23, 3
      %s595 = scalar_select %p594, %s23, 3
      %s596 = smul.addr %s595, 8
      %s597 = scalar_lea.vmem %s11, %s596
      %v598 = vld [vmem:[%s535] sm:$0xff]
      %v599 = vld [vmem:[%s543] sm:$0xff]
      %v600 = vsub.f32 %v598, %v599
      %v601 = vmul.f32 %v600, %v600
      %v602 = vlaneseq
      %v603 = vshrl.u32 %v602, 7
      %s604 = smul.u32 %s23, 8
      %v605 = vstv %s604
      %v606 = vadd.s32 %v603, %v605
      %vm607 = vcmp.lt.s32.totalorder %v606, 8
      %v608 = vsel %vm607, 1, 0
      %vm609 = vcmp.eq.s32.totalorder %v608, 1
      %v610 = vsel %vm609, %v601, 0.0
      %v611 = vadd.f32 %v610, 0.0
      %612 = vst [vmem:[%s585] sm:$0xff] %v611
      %v613 = vld [vmem:[%s551] sm:$0xff]
      %v614 = vld [vmem:[%s559] sm:$0xff]
      %v615 = vsub.f32 %v613, %v614
      %v616 = vmul.f32 %v615, %v615
      %v617 = vsel %vm609, %v616, 0.0
      %v618 = vadd.f32 %v617, 0.0
      %619 = vst [vmem:[%s589] sm:$0xff] %v618
      %v620 = vld [vmem:[%s565] sm:$0xff]
      %v621 = vld [vmem:[%s569] sm:$0xff]
      %v622 = vsub.f32 %v620, %v621
      %v623 = vmul.f32 %v622, %v622
      %v624 = vadd.f32 %v623, 0.0
      %625 = vst [vmem:[%s593] sm:$0xff] %v624
      %v626 = vld [vmem:[%s574] sm:$0xff]
      %v627 = vld [vmem:[%s574 + $0x8] sm:$0xff]
      %v628 = vld [vmem:[%s574 + $0x10] sm:$0xff]
      %v629 = vld [vmem:[%s580] sm:$0xff]
      %v630 = vld [vmem:[%s580 + $0x8] sm:$0xff]
      %v631 = vld [vmem:[%s580 + $0x10] sm:$0xff]
      %v632 = vsub.f32 %v626, %v629
      %v633 = vsub.f32 %v627, %v630
      %v634 = vsub.f32 %v628, %v631
      %v635 = vmul.f32 %v632, %v632
      %v636 = vmul.f32 %v633, %v633
      %v637 = vmul.f32 %v634, %v634
      %v638 = vadd.f32 %v635, %v636
      %v639 = vadd.f32 %v638, %v637
      %640 = vst [vmem:[%s597] sm:$0xff] %v639
      %p641 = scmp.lt.s32.totalorder %s23, 3
      %s642 = scalar_select %p641, %s23, 3
      %s643 = smul.addr %s642, 8
      %s644 = scalar_lea.vmem %s8, %s643
      %p645 = scmp.lt.s32.totalorder %s23, 3
      %s646 = scalar_select %p645, %s23, 3
      %s647 = smul.addr %s646, 8
      %s648 = scalar_lea.vmem %s9, %s647
      %p649 = scmp.lt.s32.totalorder %s23, 3
      %s650 = scalar_select %p649, %s23, 3
      %s651 = smul.addr %s650, 8
      %s652 = scalar_lea.vmem %s10, %s651
      %p653 = scmp.lt.s32.totalorder %s23, 3
      %s654 = scalar_select %p653, %s23, 3
      %s655 = smul.addr %s654, 8
      %s656 = scalar_lea.vmem %s11, %s655
      // Predicated region
      $region53: #{block_nerf_loss.1} parent=51 // pred_check
        %p657 = pneg %p265
      $region54: #{block_nerf_loss.1} parent=51 // pred_check_branch
        %659 = sbr.rel (%p657) target = $region56
      $region55: #{block_nerf_loss.1} parent=51 // pred_region
        _
      $region56: #{block_nerf_loss.1} parent=51 // pred_fallthru
        _
      // Predicated region
      $region57: #{block_nerf_loss.1} parent=51 // pred_check
        %p660 = pneg %p291
      $region58: #{block_nerf_loss.1} parent=51 // pred_check_branch
        %662 = sbr.rel (%p660) target = $region60
      $region59: #{block_nerf_loss.1} parent=51 // pred_region
        _
      $region60: #{block_nerf_loss.1} parent=51 // pred_fallthru
        _
      // Predicated region
      $region61: #{block_nerf_loss.1} parent=51 // pred_check
        %p663 = pneg %p317
      $region62: #{block_nerf_loss.1} parent=51 // pred_check_branch
        %665 = sbr.rel (%p663) target = $region64
      $region63: #{block_nerf_loss.1} parent=51 // pred_region
        _
      $region64: #{block_nerf_loss.1} parent=51 // pred_fallthru
        _
      // Predicated region
      $region65: #{block_nerf_loss.1} parent=51 // pred_check
        %p666 = pneg %p343
      $region66: #{block_nerf_loss.1} parent=51 // pred_check_branch
        %668 = sbr.rel (%p666) target = $region68
      $region67: #{block_nerf_loss.1} parent=51 // pred_region
        _
      $region68: #{block_nerf_loss.1} parent=51 // pred_fallthru
        _
    $region52: #{block_nerf_loss.1} parent=5 // pred_fallthru
      _
    %p669 = scmp.le.s32.totalorder 2, %s18
    // Predicated region
    $region69: #{block_nerf_loss.1} parent=5 // pred_check
      %p670 = pneg %p669
    $region70: #{block_nerf_loss.1} parent=5 // pred_check_branch
      %672 = sbr.rel (%p670) target = $region72
    $region71: #{block_nerf_loss.1} parent=5 // pred_region
      %s673 = ssub.s32 %s18, 2
      // Predicated region
      $region73: #{block_nerf_loss.1} parent=71 // pred_check
        %p674 = pneg %p271
      $region74: #{block_nerf_loss.1} parent=71 // pred_check_branch
        %676 = sbr.rel (%p674) target = $region76
      $region75: #{block_nerf_loss.1} parent=71 // pred_region
        %p677 = scmp.lt.s32.totalorder %s24, 3
        %s678 = scalar_select %p677, %s24, 3
        %s679 = smul.addr %s678, 8
        %s680 = scalar_lea.vmem %s8, %s679
      $region76: #{block_nerf_loss.1} parent=71 // pred_fallthru
        _
      // Predicated region
      $region77: #{block_nerf_loss.1} parent=71 // pred_check
        %p681 = pneg %p297
      $region78: #{block_nerf_loss.1} parent=71 // pred_check_branch
        %683 = sbr.rel (%p681) target = $region80
      $region79: #{block_nerf_loss.1} parent=71 // pred_region
        %p684 = scmp.lt.s32.totalorder %s24, 3
        %s685 = scalar_select %p684, %s24, 3
        %s686 = smul.addr %s685, 8
        %s687 = scalar_lea.vmem %s9, %s686
      $region80: #{block_nerf_loss.1} parent=71 // pred_fallthru
        _
      // Predicated region
      $region81: #{block_nerf_loss.1} parent=71 // pred_check
        %p688 = pneg %p323
      $region82: #{block_nerf_loss.1} parent=71 // pred_check_branch
        %690 = sbr.rel (%p688) target = $region84
      $region83: #{block_nerf_loss.1} parent=71 // pred_region
        %p691 = scmp.lt.s32.totalorder %s24, 3
        %s692 = scalar_select %p691, %s24, 3
        %s693 = smul.addr %s692, 8
        %s694 = scalar_lea.vmem %s10, %s693
      $region84: #{block_nerf_loss.1} parent=71 // pred_fallthru
        _
      // Predicated region
      $region85: #{block_nerf_loss.1} parent=71 // pred_check
        %p695 = pneg %p349
      $region86: #{block_nerf_loss.1} parent=71 // pred_check_branch
        %697 = sbr.rel (%p695) target = $region88
      $region87: #{block_nerf_loss.1} parent=71 // pred_region
        %p698 = scmp.lt.s32.totalorder %s24, 3
        %s699 = scalar_select %p698, %s24, 3
        %s700 = smul.addr %s699, 8
        %s701 = scalar_lea.vmem %s11, %s700
      $region88: #{block_nerf_loss.1} parent=71 // pred_fallthru
        _
    $region72: #{block_nerf_loss.1} parent=5 // pred_fallthru
      _
  $region6: #{block_nerf_loss.1} parent=0 // loop_footer
    %s22 = sadd.s32 1, %s18
  $region7: #{block_nerf_loss.1} parent=0 // loop_footer_branch
    %17 = sbr.rel target = $region3
  $region8: #{block_nerf_loss.1} parent=0 // loop_exit
    _

</llo_original>
